<compile_context>
chip_gen: v7x
topology: tpu7x:2x2x1
jax: 0.10.0
libtpu: 0.0.40
codegen_flags: <defaults>
</compile_context>

<pallas_src>
import jax
import jax.numpy as jnp
from jax.experimental import pallas as pl
from jax.experimental.pallas import tpu as pltpu


# ---------------------------------------------------------------------------
# Hot path: Identity.forward / Identity.inverse — no kernel at all.
# ---------------------------------------------------------------------------
def identity_forward(x: jax.Array) -> jax.Array:
    """Identity.forward(x) = x. The best kernel is no kernel."""
    return x


def identity_inverse(x: jax.Array):
    """Identity.inverse(x) -> (x, logdet=0). logdet is a host-side constant."""
    return x, jnp.zeros((), dtype=jnp.float32)


# ---------------------------------------------------------------------------
# Optional: explicit materializing copy (only if a fresh buffer is required).
# ---------------------------------------------------------------------------
def _copy_kernel(x_ref, o_ref):
    o_ref[...] = x_ref[...]


def identity_copy_pallas(x: jax.Array, target_block_bytes: int = 1 << 20) -> jax.Array:
    """Lane-dense, row-tiled HBM->HBM copy with pipelined DMA.

    Use only when a genuinely fresh buffer is needed; otherwise prefer
    identity_forward (which copies nothing).
    """
    orig_shape = x.shape
    dtype = x.dtype
    n = x.size
    if n == 0:
        return x

    itemsize = x.dtype.itemsize
    # Second-to-last block dim must be a multiple of the packing factor
    # (8 for 4-byte, 16 for 2-byte, 32 for 1-byte dtypes) unless it equals
    # the full extent.
    sublane = {4: 8, 2: 16, 1: 32}.get(itemsize, 8)

    flat = x.reshape(n)

    # Pick the widest lane-dense column count that divides n exactly.
    cols = 0
    for c in (1024, 512, 256, 128):
        if n % c == 0:
            cols = c
            break

    pad = 0
    if cols == 0:
        if n * itemsize <= (256 << 10):
            # Genuinely tiny / odd array: a single full-array block is legal
            # for any shape and trivially fits VMEM.
            y2 = pl.pallas_call(
                _copy_kernel,
                out_shape=jax.ShapeDtypeStruct((1, n), dtype),
                in_specs=[pl.BlockSpec((1, n), lambda: (0, 0))],
                out_specs=pl.BlockSpec((1, n), lambda: (0, 0)),
            )(flat.reshape(1, n))
            return y2.reshape(orig_shape)
        # Large odd-sized array: pad to a multiple of 1024 lanes and tile,
        # so we never place the whole array in VMEM as one block.
        cols = 1024
        pad = (-n) % cols
        flat = jnp.pad(flat, (0, pad))

    x2 = flat.reshape(flat.size // cols, cols)
    rows = x2.shape[0]

    # Row-block sized for ~target_block_bytes per block, sublane-aligned.
    rb = max(1, target_block_bytes // (cols * itemsize))
    rb = min(rb, rows)
    if rb != rows:
        rb = max(sublane, (rb // sublane) * sublane)
        rb = min(rb, rows)

    y2 = pl.pallas_call(
        _copy_kernel,
        out_shape=jax.ShapeDtypeStruct((rows, cols), dtype),
        grid=(pl.cdiv(rows, rb),),
        in_specs=[pl.BlockSpec((rb, cols), lambda i: (i, 0))],
        out_specs=pl.BlockSpec((rb, cols), lambda i: (i, 0)),
        compiler_params=pltpu.CompilerParams(
            # Independent row tiles: lets Mosaic shard the copy across both
            # TensorCores on v7x; harmless on v5e/v6e.
            dimension_semantics=("parallel",),
        ),
    )(x2)

    flat_out = y2.reshape(flat.size)
    if pad:
        flat_out = flat_out[:n]
    return flat_out.reshape(orig_shape)


if __name__ == "__main__":
    # hparams consistent with the module: channels=32, batch_size=2.
    hparams = {"channels": 32, "batch_size": 2}

    key = jax.random.PRNGKey(0)
    # make_normal_batch: standard-normal samples of shape (batch, channels).
    x = jax.random.normal(
        key, (hparams["batch_size"], hparams["channels"]), dtype=jnp.float32
    )

    # Hot path: pure pass-through (no kernel, no copy).
    y = jax.block_until_ready(identity_forward(x))
    inv, logdet = identity_inverse(x)
    inv = jax.block_until_ready(inv)

    # Pallas copy kernel, exercised on both the tiny-odd path and the
    # lane-dense tiled path.
    y_copy_small = jax.block_until_ready(identity_copy_pallas(x))

    key2 = jax.random.PRNGKey(1)
    x_big = jax.random.normal(key2, (16, 256), dtype=jnp.float32)  # 4096 elems
    y_copy_big = jax.block_until_ready(identity_copy_pallas(x_big))

    assert y.shape == x.shape and y.dtype == x.dtype
    assert jnp.array_equal(y, x)
    assert jnp.array_equal(inv, x)
    assert float(logdet) == 0.0
    assert y_copy_small.shape == x.shape and y_copy_small.dtype == x.dtype
    assert jnp.array_equal(y_copy_small, x)
    assert y_copy_big.shape == x_big.shape
    assert jnp.array_equal(y_copy_big, x_big)

    print("KERNEL_OK")
</pallas_src>

<mosaic_0001>
module attributes {stable_mosaic.version = 11 : i64} {
  func.func @_copy_kernel(%arg0: memref<1x64xf32, #tpu.memory_space<vmem>>, %arg1: memref<1x64xf32, #tpu.memory_space<vmem>>) attributes {dimension_semantics = [], scalar_prefetch = 0 : i64, scratch_operands = 0 : i64, tpu.core_type = #tpu.core_type<tc>} {
    %c0 = arith.constant 0 : index
    %c0_0 = arith.constant 0 : index
    %0 = vector.load %arg0[%c0, %c0_0] : memref<1x64xf32, #tpu.memory_space<vmem>>, vector<1x64xf32>
    %c0_1 = arith.constant 0 : index
    %c0_2 = arith.constant 0 : index
    %1 = vector.load %arg1[%c0_1, %c0_2] : memref<1x64xf32, #tpu.memory_space<vmem>>, vector<1x64xf32>
    tpu.vector_store %arg1[%c0_1, %c0_2], %0 {strides = array<i32>} : memref<1x64xf32, #tpu.memory_space<vmem>>, vector<1x64xf32>,
    return
  }
}

</mosaic_0001>

<llo_original>
// kernel: tpu_custom_call.1
$region0: #{tpu_custom_call.1}
  #allocation0 [shape = 'u32[]', space=smem, size = 0x4, offset = 0x4, fixed_abs, tag = 'smem constant byte address 0x4 - core index']
  #allocation1 [shape = 'u32[144,128]{1,0:T(1,128)}', space=vmem, size = 0x12000, scoped, tag = 'internal scratch']
  %s0 = inlined_call_operand.hbm [shape: f32[1,64], index: 0, kind: input, shape index: {}]
  %s1 = inlined_call_operand.hbm [shape: f32[1,64], index: 1, kind: output, shape index: {}]
  %s2 = sld [smem:[#allocation0]]
  $region18: #{tpu_custom_call.1} parent=0
    _
  %s4 = ssub.s32 1, %s2
  %s5 = scalar_select 0, %s4, %s2
  $region1: #{tpu_custom_call.1} parent=0
    #allocation2 [shape = 'u8[512]{0}', space=vmem, size = 0x400, scoped, tag = 'input window, operand 0, single buffered']
    #allocation3 [shape = 's32[1]{0}', space=sflag, size = 0x4, scoped, tag = 'scoped memory for tpu_custom_call.1']
    #allocation4 [shape = 's32[1]{0}', space=sflag, size = 0x4, scoped, tag = 'scoped memory for tpu_custom_call.1']
    #allocation5 [shape = 'u8[512]{0}', space=vmem, size = 0x400, scoped, tag = 'output window, operand 0, single buffered']
    %6 = vsyncpa [#allocation3], 0
    %7 = vsyncpa [#allocation4], 0
    // Predicated region
    $region2: #{tpu_custom_call.1} parent=1 // pred_check
      _
    $region3: #{tpu_custom_call.1} parent=1 // pred_check_branch
      %9 = sbr.rel (0) target = $region5
    $region4: #{tpu_custom_call.1} parent=1 // pred_region
      %s11 = ssub.s32 16, 16
      %12 = vsyncadd [#allocation3], %s11
      %s14 = sshll.u32 [#allocation2], 4
      %s15 = int_to_ptr.vmem [resolvable:$true] %s14
      %17 = dma.hbm_to_vmem [thread:$0]  %s0, 16, %s15, [#allocation3]
    $region5: #{tpu_custom_call.1} parent=1 // pred_fallthru
      _
    // Predicated region
    $region6: #{tpu_custom_call.1} parent=1 // pred_check
      _
    $region7: #{tpu_custom_call.1} parent=1 // pred_check_branch
      %19 = sbr.rel (0) target = $region9
    $region8: #{tpu_custom_call.1} parent=1 // pred_region
      %20 = dma.done [#allocation3], 16
    $region9: #{tpu_custom_call.1} parent=1 // pred_fallthru
      _
    %v21 = vld [vmem:[#allocation2] sm:$0x1]
    %vm22 = vcmask 516096
    %23 = vst.msk [vmem:[#allocation5] sm:$0x1] %vm22, %v21
    // Predicated region
    $region10: #{tpu_custom_call.1} parent=1 // pred_check
      _
    $region11: #{tpu_custom_call.1} parent=1 // pred_check_branch
      %25 = sbr.rel (0) target = $region13
    $region12: #{tpu_custom_call.1} parent=1 // pred_region
      %s27 = ssub.s32 16, 16
      %28 = vsyncadd [#allocation4], %s27
      %s30 = sshll.u32 [#allocation5], 4
      %s31 = int_to_ptr.vmem [resolvable:$true] %s30
      %33 = dma.vmem_to_hbm [thread:$0]  %s31, 16, %s1, [#allocation4]
    $region13: #{tpu_custom_call.1} parent=1 // pred_fallthru
      _
    // Predicated region
    $region14: #{tpu_custom_call.1} parent=1 // pred_check
      _
    $region15: #{tpu_custom_call.1} parent=1 // pred_check_branch
      %35 = sbr.rel (0) target = $region17
    $region16: #{tpu_custom_call.1} parent=1 // pred_region
      %36 = dma.done [#allocation4], 16
    $region17: #{tpu_custom_call.1} parent=1 // pred_fallthru
      _
    %37 = vsyncpa [#allocation3], 1
    %38 = vsyncpa [#allocation4], 1

</llo_original>
